<compile_context>
chip_gen: v6e
topology: v6e:2x2x1
jax: 0.10.0
libtpu: 0.0.40
codegen_flags: <defaults>
</compile_context>

<pallas_src>
import jax
import jax.numpy as jnp
from jax.experimental import pallas as pl
from jax.experimental.pallas import tpu as pltpu


def _fused_head_kernel(x_ref, w_ref, b_ref, o_ref):
    # x_ref: (TB, H)   w_ref: (H, 2)   b_ref: (1, 2) f32   o_ref: (TB, 2) f32
    logits = jnp.dot(x_ref[...], w_ref[...],
                     preferred_element_type=jnp.float32) + b_ref[...]      # (TB, 2)

    # Numerically stable softmax over the (2-wide) class dim. After fusion this
    # is negligible next to the DMA of x; output store is lane-sparse (2/128
    # lanes) but its bytes are tiny compared with the x stream.
    m = jnp.max(logits, axis=-1, keepdims=True)
    e = jnp.exp(logits - m)
    o_ref[...] = (e / jnp.sum(e, axis=-1, keepdims=True)).astype(o_ref.dtype)


def softmax_output(x, w1, b1, w2, b2, *, block_b=None):
    """Forward pass of SoftMaxOutput downstream of the backbone.

    x : (B, hidden) backbone features (f32 or bf16).
    w1: (hidden, 150), b1: (1, 150), w2: (150, 2), b2: (1, 2)  (pre-transposed).
    Returns (B, 2) f32 class probabilities.
    """
    B, H = x.shape
    itemsize = jnp.dtype(x.dtype).itemsize

    # Algebraic fusion of the two affine layers (computed once by XLA, outside
    # the kernel): logits = x @ (w1 @ w2) + (b1 @ w2 + b2).
    w_fused = (w1.astype(jnp.float32) @ w2.astype(jnp.float32)).astype(x.dtype)  # (H, 2)
    b_fused = b1.astype(jnp.float32) @ w2.astype(jnp.float32) + b2.astype(jnp.float32)  # (1, 2)

    # Batch tile: ~4 MiB of x per buffer (x2 for double-buffering -> ~8 MiB),
    # which fits the scoped-VMEM default on v5e (16 MiB) / v6e (32) / v7x (32),
    # while being large enough to amortize the ~0.35 us per-grid-step overhead.
    if block_b is None:
        budget = 4 * 1024 * 1024
        block_b = budget // max(1, H * itemsize)
        block_b = max(8, min(2048, (block_b // 8) * 8))          # multiple of 8 sublanes
        block_b = min(block_b, max(8, int(pl.next_power_of_2(B))))  # don't over-tile tiny B

    n_blocks = pl.cdiv(B, block_b)
    b_pad = n_blocks * block_b
    if b_pad != B:
        # Zero-pad the partial last tile; padded rows produce valid (discarded)
        # softmax rows, never garbage stores.
        x = jnp.pad(x, ((0, b_pad - B), (0, 0)))

    out = pl.pallas_call(
        _fused_head_kernel,
        out_shape=jax.ShapeDtypeStruct((b_pad, 2), jnp.float32),
        grid=(n_blocks,),
        in_specs=[
            pl.BlockSpec((block_b, H), lambda i: (i, 0)),   # streamed x tiles
            pl.BlockSpec((H, 2), lambda i: (0, 0)),         # fused weight, resident
            pl.BlockSpec((1, 2), lambda i: (0, 0)),         # fused bias, resident
        ],
        out_specs=pl.BlockSpec((block_b, 2), lambda i: (i, 0)),
        compiler_params=pltpu.CompilerParams(
            dimension_semantics=("parallel",),               # megacore sharding on v7x
        ),
        cost_estimate=pl.CostEstimate(
            flops=2 * b_pad * H * 2,
            transcendentals=2 * b_pad,
            bytes_accessed=b_pad * H * itemsize + H * 2 * itemsize + b_pad * 2 * 4,
        ),
    )(x, w_fused, b_fused)

    return out[:B] if b_pad != B else out


def reference(x, w1, b1, w2, b2):
    # Un-fused path, matching the PyTorch module exactly.
    h = x.astype(jnp.float32) @ w1 + b1
    logits = h @ w2 + b2
    return jax.nn.softmax(logits, axis=1)


if __name__ == "__main__":
    batch = 2
    hidden = 32

    key = jax.random.PRNGKey(0)
    k_x, k_w1, k_b1, k_w2, k_b2 = jax.random.split(key, 5)

    # Stand-in for `model(input)` output: (batch, hidden_size) features.
    x = jax.random.normal(k_x, (batch, hidden), dtype=jnp.float32)

    # Deterministic parameter init (PyTorch-Linear-style uniform bounds),
    # stored pre-transposed as (in_features, out_features).
    bound1 = 1.0 / jnp.sqrt(hidden)
    w1 = jax.random.uniform(k_w1, (hidden, 150), jnp.float32, -bound1, bound1)
    b1 = jax.random.uniform(k_b1, (1, 150), jnp.float32, -bound1, bound1)
    bound2 = 1.0 / jnp.sqrt(150.0)
    w2 = jax.random.uniform(k_w2, (150, 2), jnp.float32, -bound2, bound2)
    b2 = jax.random.uniform(k_b2, (1, 2), jnp.float32, -bound2, bound2)

    out = jax.block_until_ready(softmax_output(x, w1, b1, w2, b2))

    ref = reference(x, w1, b1, w2, b2)
    assert out.shape == (batch, 2)
    assert jnp.allclose(out, ref, atol=1e-5, rtol=1e-5), "mismatch vs reference"
    assert jnp.allclose(jnp.sum(out, axis=1), 1.0, atol=1e-5), "rows must sum to 1"

    print("KERNEL_OK")
</pallas_src>

<mosaic_0001>
module attributes {stable_mosaic.version = 11 : i64} {
  func.func @_fused_head_kernel(%arg0: i32, %arg1: memref<8x32xf32, #tpu.memory_space<vmem>>, %arg2: memref<32x2xf32, #tpu.memory_space<vmem>>, %arg3: memref<1x2xf32, #tpu.memory_space<vmem>>, %arg4: memref<8x2xf32, #tpu.memory_space<vmem>>) attributes {dimension_semantics = [#tpu.dimension_semantics<parallel>], iteration_bounds = array<i64: 1>, scalar_prefetch = 0 : i64, scratch_operands = 0 : i64, tpu.core_type = #tpu.core_type<tc>, window_params = [{transform_indices = @transform_0, window_bounds = array<i64: 8, 32>}, {pipeline_mode = #tpu.pipeline_mode<synchronous>, transform_indices = @transform_1, window_bounds = array<i64: 32, 2>}, {pipeline_mode = #tpu.pipeline_mode<synchronous>, transform_indices = @transform_2, window_bounds = array<i64: 1, 2>}, {transform_indices = @transform_3, window_bounds = array<i64: 8, 2>}]} {
    %c0 = arith.constant 0 : index
    %c0_0 = arith.constant 0 : index
    %0 = vector.load %arg1[%c0, %c0_0] : memref<8x32xf32, #tpu.memory_space<vmem>>, vector<8x32xf32>
    %c0_1 = arith.constant 0 : index
    %c0_2 = arith.constant 0 : index
    %1 = vector.load %arg2[%c0_1, %c0_2] : memref<32x2xf32, #tpu.memory_space<vmem>>, vector<32x2xf32>
    %cst = arith.constant dense<0.000000e+00> : vector<8x2xf32>
    %2 = tpu.matmul %0, %1, %cst {dimension_numbers = #tpu.dot_dimension_numbers<[1], [0], [0], [1], [0, 0, 1, 1], [], []>} : vector<8x32xf32>, vector<32x2xf32>, vector<8x2xf32> -> vector<8x2xf32>
    %c0_3 = arith.constant 0 : index
    %c0_4 = arith.constant 0 : index
    %3 = vector.load %arg3[%c0_3, %c0_4] : memref<1x2xf32, #tpu.memory_space<vmem>>, vector<1x2xf32>
    %4 = vector.broadcast %3 : vector<1x2xf32> to vector<8x2xf32>
    %5 = arith.addf %2, %4 : vector<8x2xf32>
    %cst_5 = arith.constant dense<0xFF800000> : vector<8xf32>
    %6 = vector.multi_reduction <maximumf>, %5, %cst_5 [1] : vector<8x2xf32> to vector<8xf32>
    %7 = vector.shape_cast %6 : vector<8xf32> to vector<8x1xf32>
    %8 = vector.broadcast %7 : vector<8x1xf32> to vector<8x2xf32>
    %9 = arith.subf %5, %8 : vector<8x2xf32>
    %10 = math.exp %9 : vector<8x2xf32>
    %cst_6 = arith.constant dense<0.000000e+00> : vector<8xf32>
    %11 = vector.multi_reduction <add>, %10, %cst_6 [1] : vector<8x2xf32> to vector<8xf32>
    %12 = vector.shape_cast %11 : vector<8xf32> to vector<8x1xf32>
    %13 = vector.broadcast %12 : vector<8x1xf32> to vector<8x2xf32>
    %14 = arith.divf %10, %13 : vector<8x2xf32>
    %c0_7 = arith.constant 0 : index
    %c0_8 = arith.constant 0 : index
    %15 = vector.load %arg4[%c0_7, %c0_8] : memref<8x2xf32, #tpu.memory_space<vmem>>, vector<8x2xf32>
    tpu.vector_store %arg4[%c0_7, %c0_8], %14 {strides = array<i32>} : memref<8x2xf32, #tpu.memory_space<vmem>>, vector<8x2xf32>,
    return
  }
  func.func @transform_0(%arg0: i32) -> (i32, i32) {
    %c0_i32 = arith.constant 0 : i32
    %c0_i32_0 = arith.constant 0 : i32
    return %arg0, %c0_i32 : i32, i32
  }
  func.func @transform_1(%arg0: i32) -> (i32, i32) {
    %c0_i32 = arith.constant 0 : i32
    %c0_i32_0 = arith.constant 0 : i32
    %c0_i32_1 = arith.constant 0 : i32
    return %c0_i32, %c0_i32_0 : i32, i32
  }
  func.func @transform_2(%arg0: i32) -> (i32, i32) {
    %c0_i32 = arith.constant 0 : i32
    %c0_i32_0 = arith.constant 0 : i32
    %c0_i32_1 = arith.constant 0 : i32
    return %c0_i32, %c0_i32_0 : i32, i32
  }
  func.func @transform_3(%arg0: i32) -> (i32, i32) {
    %c0_i32 = arith.constant 0 : i32
    %c0_i32_0 = arith.constant 0 : i32
    return %arg0, %c0_i32 : i32, i32
  }
}

</mosaic_0001>

<llo_original>
// kernel: tpu_custom_call.1
$region0: #{tpu_custom_call.1}
  #allocation0 [shape = 'u32[]', space=smem, size = 0x4, offset = 0x4, fixed_abs, tag = 'smem constant byte address 0x4 - core index']
  #allocation1 [shape = 'u32[144,128]{1,0:T(1,128)}', space=vmem, size = 0x12000, scoped, tag = 'internal scratch']
  %s0 = inlined_call_operand.vmem [shape: f32[8,32], index: 0, kind: input, shape index: {}]
  %s1 = inlined_call_operand.vmem [shape: f32[32,2], index: 1, kind: input, shape index: {}]
  %s2 = inlined_call_operand.vmem [shape: f32[1,2], index: 2, kind: input, shape index: {}]
  %s3 = inlined_call_operand.vmem [shape: f32[8,2], index: 3, kind: output, shape index: {}]
  %s4 = sld [smem:[#allocation0]]
  $region22: #{tpu_custom_call.1} parent=0
    _
  %s6 = ssub.s32 1, %s4
  %s7 = scalar_select 0, %s6, %s4
  // Predicated region
  $region2: #{tpu_custom_call.1} parent=0 // pred_check
    _
  $region3: #{tpu_custom_call.1} parent=0 // pred_check_branch
    %9 = sbr.rel (0) target = $region5
  $region4: #{tpu_custom_call.1} parent=0 // pred_region
    _
  $region5: #{tpu_custom_call.1} parent=0 // pred_fallthru
    _
  // Predicated region
  $region6: #{tpu_custom_call.1} parent=0 // pred_check
    _
  $region7: #{tpu_custom_call.1} parent=0 // pred_check_branch
    %11 = sbr.rel (0) target = $region9
  $region8: #{tpu_custom_call.1} parent=0 // pred_region
    _
  $region9: #{tpu_custom_call.1} parent=0 // pred_fallthru
    _
  // Predicated region
  $region10: #{tpu_custom_call.1} parent=0 // pred_check
    _
  $region11: #{tpu_custom_call.1} parent=0 // pred_check_branch
    %13 = sbr.rel (0) target = $region13
  $region12: #{tpu_custom_call.1} parent=0 // pred_region
    _
  $region13: #{tpu_custom_call.1} parent=0 // pred_fallthru
    _
  %v14 = vld [vmem:[%s0] sm:$0xff]
  %v15 = vld [vmem:[%s1] sm:$0xff]
  %v16 = vld [vmem:[%s1 + $0x8] sm:$0xff]
  %v17 = vld [vmem:[%s1 + $0x10] sm:$0xff]
  %v18 = vld [vmem:[%s1 + $0x18] sm:$0xff]
  %v19 = vld [vmem:[%s2] sm:$0x1]
  %v21 = vlaneseq
  %v22 = vshrl.u32 %v21, 7
  %v23 = vsub.s32 0, %v22
  %v24 = vrot.slane %v19, %v23
  %vm26 = vcmask 261120
  %v28 = vsel %vm26, %v14, 0
  %30 = vmatprep.subr.mxu0 0.0
  %31 = vmatpush1.msra.mxu0 0.0
  %32 = vmatprep.subr.mxu0 0.0
  %33 = vmatpush1.msra.mxu0 0.0
  %34 = vmatprep.subr.mxu0 0.0
  %35 = vmatpush1.msra.mxu0 0.0
  %36 = vmatprep.subr.mxu0 0.0
  %37 = vmatpush1.msra.mxu0 0.0
  %38 = vmatprep.subr.mxu0 0.0
  %39 = vmatpush1.msra.mxu0 0.0
  %40 = vmatprep.subr.mxu0 0.0
  %41 = vmatpush1.msra.mxu0 0.0
  %42 = vmatprep.subr.mxu0 0.0
  %43 = vmatpush1.msra.mxu0 0.0
  %44 = vmatprep.subr.mxu0 0.0
  %45 = vmatpush1.msra.mxu0 0.0
  %46 = vmatprep.subr.mxu0 0.0
  %47 = vmatpush1.msra.mxu0 0.0
  %48 = vmatprep.subr.mxu0 0.0
  %49 = vmatpush1.msra.mxu0 0.0
  %50 = vmatprep.subr.mxu0 0.0
  %51 = vmatpush1.msra.mxu0 0.0
  %52 = vmatprep.subr.mxu0 0.0
  %53 = vmatpush1.msra.mxu0 0.0
  %54 = vmatprep.subr.mxu0 0.0
  %55 = vmatpush1.msra.mxu0 %v18
  %56 = vmatprep.subr.mxu0 0.0
  %57 = vmatpush1.msra.mxu0 %v17
  %58 = vmatprep.subr.mxu0 0.0
  %59 = vmatpush1.msra.mxu0 %v16
  %60 = vmatprep.subr.mxu0 0.0
  %61 = vmatpush1.msra.mxu0 %v15
  %62 = vmatprep.subr.mxu0 0.0
  %63 = vmatpush2.msra.mxu0 0.0
  %64 = vmatprep.subr.mxu0 0.0
  %65 = vmatpush2.msra.mxu0 0.0
  %66 = vmatprep.subr.mxu0 0.0
  %67 = vmatpush2.msra.mxu0 0.0
  %68 = vmatprep.subr.mxu0 0.0
  %69 = vmatpush2.msra.mxu0 0.0
  %70 = vmatprep.subr.mxu0 0.0
  %71 = vmatpush2.msra.mxu0 0.0
  %72 = vmatprep.subr.mxu0 0.0
  %73 = vmatpush2.msra.mxu0 0.0
  %74 = vmatprep.subr.mxu0 0.0
  %75 = vmatpush2.msra.mxu0 0.0
  %76 = vmatprep.subr.mxu0 0.0
  %77 = vmatpush2.msra.mxu0 0.0
  %78 = vmatprep.subr.mxu0 0.0
  %79 = vmatpush2.msra.mxu0 0.0
  %80 = vmatprep.subr.mxu0 0.0
  %81 = vmatpush2.msra.mxu0 0.0
  %82 = vmatprep.subr.mxu0 0.0
  %83 = vmatpush2.msra.mxu0 0.0
  %84 = vmatprep.subr.mxu0 0.0
  %85 = vmatpush2.msra.mxu0 0.0
  %86 = vmatprep.subr.mxu0 0.0
  %87 = vmatpush2.msra.mxu0 0.0
  %88 = vmatprep.subr.mxu0 0.0
  %89 = vmatpush2.msra.mxu0 0.0
  %90 = vmatprep.subr.mxu0 0.0
  %91 = vmatpush2.msra.mxu0 0.0
  %92 = vmatprep.subr.mxu0 0.0
  %93 = vmatpush2.msra.mxu0 0.0
  %94 = vmatprep.mubr.f32.mxu0 0.0
  %95 = vmatmul.mubr.f32.gmra.mxu0 %v28
  %v96 = vpop.f32.mrf.mxu0
  %v97 = vadd.f32 %v24, %v96
  %v98 = vpop.f32.mrf.mxu0
  %99 = vdwg.mxu0
  %vm100 = vcmask 15360
  %v101 = vsel %vm100, %v97, -inf
  %102 = vmax.xlane.f32.xlu0 %v101
  %v103 = vpop.xlane.xlu0 %102
  %v104 = vsub.f32 %v97, %v103
  %v105 = vmul.f32 %v104, 1.442695
  %v106 = vpow.pop %v105
  %v107 = vsel %vm100, %v106, 0.0
  %108 = vadd.xlane.f32.xlu0 %v107
  %v109 = vpop.xlane.xlu0 %108
  %v110 = vrcp.pop %v109
  %v111 = vmul.f32 %v106, %v110
  %112 = vst.msk [vmem:[%s3] sm:$0xff] %vm100, %v111
  // Predicated region
  $region14: #{tpu_custom_call.1} parent=0 // pred_check
    _
  $region15: #{tpu_custom_call.1} parent=0 // pred_check_branch
    %114 = sbr.rel (0) target = $region17
  $region16: #{tpu_custom_call.1} parent=0 // pred_region
    _
  $region17: #{tpu_custom_call.1} parent=0 // pred_fallthru
    _
  // Predicated region
  $region18: #{tpu_custom_call.1} parent=0 // pred_check
    _
  $region19: #{tpu_custom_call.1} parent=0 // pred_check_branch
    %116 = sbr.rel (0) target = $region21
  $region20: #{tpu_custom_call.1} parent=0 // pred_region
    _
  $region21: #{tpu_custom_call.1} parent=0 // pred_fallthru
    _

</llo_original>
